<compile_context>
chip_gen: v7x
topology: tpu7x:2x2x1
jax: 0.10.0
libtpu: 0.0.40
codegen_flags: <defaults>
</compile_context>

<pallas_src>
import math

import jax
import jax.numpy as jnp
import numpy as np
from jax.experimental import pallas as pl
from jax.experimental.pallas import tpu as pltpu


# ----------------------------------------------------------------------------
# Fused kernel: conditioning (once per batch) + FiLM + 1x1 conv on (C, THW)
# ----------------------------------------------------------------------------
def make_fused_kernel(C, x_dtype, compute_dtype, recompute_each_tile):
    use_mxu = C > 8

    def kernel(time_ref, temb_ref, mask_ref, wt_ref, bt_ref, wtxt_ref, wfs_ref,
               x_ref, w_ref, b_ref, o_ref, scale_sc, shift_sc):

        def compute_film():
            # ---- scheduler.get_condition(time.float()): cosine log-SNR ----
            t = time_ref[...].astype(jnp.float32)                      # (1,1)
            s = 0.008
            c = jnp.cos((t + s) / (1.0 + s) * (math.pi * 0.5))
            log_snr = -jnp.log(jnp.maximum(1.0 / (c * c) - 1.0, 1e-5))
            # time = time.type_as(x): round-trip through x.dtype for parity
            log_snr = log_snr.astype(x_dtype).astype(jnp.float32)

            # ---- time MLP: SiLU(log_snr * W_t + b_t) ----
            h_t = (log_snr * wt_ref[...].astype(jnp.float32)
                   + bt_ref[...].astype(jnp.float32))                  # (1,E)
            h_t = h_t * (1.0 / (1.0 + jnp.exp(-h_t)))                  # SiLU

            # ---- masked mean-pool of text_embed as a (1,S)x(S,D) MXU matmul ----
            m = mask_ref[...].astype(jnp.float32)                      # (1,S)
            num = jnp.dot(m, temb_ref[...].astype(jnp.float32),
                          preferred_element_type=jnp.float32)          # (1,D)
            den = jnp.maximum(jnp.sum(m, axis=1, keepdims=True), 1.0)  # (1,1)
            pooled = num / den

            cond = h_t + jnp.dot(pooled, wtxt_ref[...].astype(jnp.float32),
                                 preferred_element_type=jnp.float32)   # (1,E)

            # ---- fused FiLM projection: one (E, 2C) matmul ----
            film = jnp.dot(cond, wfs_ref[...].astype(jnp.float32),
                           preferred_element_type=jnp.float32)         # (1,2C)

            # Move the tiny (1,2C) lane vector onto sublanes as (C,1) columns
            # via one-hot select + lane reduce (avoids a lane->sublane relayout).
            # Also folds the "+1" of (1+scale) here, off the hot path.
            fb = jnp.broadcast_to(film, (C, 2 * C))
            lane = jax.lax.broadcasted_iota(jnp.int32, (C, 2 * C), 1)
            ch = jax.lax.broadcasted_iota(jnp.int32, (C, 2 * C), 0)
            scale_col = jnp.sum(jnp.where(lane == ch, fb, 0.0),
                                axis=1, keepdims=True) + 1.0           # 1+scale
            shift_col = jnp.sum(jnp.where(lane == ch + C, fb, 0.0),
                                axis=1, keepdims=True)                 # shift
            scale_sc[...] = scale_col.astype(scale_sc.dtype)
            shift_sc[...] = shift_col.astype(shift_sc.dtype)

        if recompute_each_tile:
            # B == 1: spatial axis stays "parallel" (v7x dual-TC); the film is
            # tiny, so recomputing it per tile is cheaper than serializing.
            compute_film()
        else:
            @pl.when(pl.program_id(1) == 0)
            def _():
                compute_film()

        # ---- hot path: FiLM modulation + 1x1 conv on the (C, THW) tile ----
        x = x_ref[...].astype(compute_dtype)
        h = x * scale_sc[...] + shift_sc[...]                          # x*(1+s)+t
        if use_mxu:
            out = jnp.dot(w_ref[...].astype(compute_dtype), h,
                          preferred_element_type=jnp.float32)
            out = out + b_ref[...].astype(jnp.float32)
        else:
            # C <= 8: a CxC matmul is <1% MXU-utilized -> unrolled VPU MACs.
            w = w_ref[...].astype(compute_dtype)
            out = jnp.broadcast_to(b_ref[...].astype(compute_dtype), h.shape)
            for cc in range(C):
                out = out + w[:, cc:cc + 1] * h[cc:cc + 1, :]
        o_ref[...] = out.astype(o_ref.dtype)

    return kernel


# ----------------------------------------------------------------------------
# Generation-aware tiling helpers
# ----------------------------------------------------------------------------
def _vmem_budget_bytes():
    """Scoped-VMEM budget from the chip's physical VMEM (v5e/v6e 128 MiB, v7x 64 MiB)."""
    try:
        cap = int(pltpu.get_tpu_info().vmem_capacity_bytes)
    except Exception:
        cap = 64 * 1024 * 1024  # conservative (v7x-sized) fallback
    return max(32 * 1024 * 1024, min(100 * 1024 * 1024, int(cap * 0.7)))


def _pick_spatial_tile(hw_pad, C, itemsize, vmem_budget, lane_cap=32768):
    """Largest 128-multiple tile whose double-buffered in+out footprint stays
    under ~half the VMEM budget (rest is weights / cond blocks / headroom)."""
    per_lane = max(1, 4 * C * itemsize)          # 2x input + 2x output buffers
    max_lanes = max(128, (vmem_budget // 2) // per_lane)
    thw = min(hw_pad, lane_cap, max_lanes)
    return max(128, (thw // 128) * 128)


# ----------------------------------------------------------------------------
# Wrapper
# ----------------------------------------------------------------------------
def continuous_ddpm_precond_forward(x, time, text_embed, text_mask, params):
    # x is NCHW [B, C, H, W]. The kernel operates on (B, C, H*W): channels on
    # sublanes, flattened spatial on lanes (lane-dense output stores).
    B, C, H, W = x.shape
    S, D = text_embed.shape[1], text_embed.shape[2]
    E = params["w_time"].shape[1]
    HW = H * W

    # bf16 hot-path math when x is bf16 (v6e/v7x bf16 VPU); f32 otherwise.
    compute_dtype = jnp.bfloat16 if x.dtype == jnp.bfloat16 else jnp.float32

    time3 = time.astype(jnp.float32).reshape(B, 1, 1)                  # time.float()
    mask3 = text_mask.astype(jnp.float32).reshape(B, 1, S)
    w_fs = jnp.concatenate([params["w_scale"], params["w_shift"]], axis=1)  # (E,2C)

    x_flat = x.reshape(B, C, HW)
    hw_pad = pl.cdiv(HW, 128) * 128

    vmem_budget = _vmem_budget_bytes()
    THW = _pick_spatial_tile(hw_pad, C, jnp.dtype(x.dtype).itemsize, vmem_budget)
    n_r = pl.cdiv(hw_pad, THW)

    # Guarantee >=2 parallel grid slices for v7x's two TensorCores.
    recompute_each_tile = (B == 1)
    if recompute_each_tile and n_r < 2 and hw_pad >= 256:
        THW = max(128, ((hw_pad // 2) // 128) * 128)
        n_r = pl.cdiv(hw_pad, THW)

    hw_full = n_r * THW
    if hw_full != HW:
        # TODO(synk): for non-128-multiple spatial sizes a masked last tile
        # (pl.BoundedSlice) would avoid this pad + output-slice round trip;
        # typical UNet resolutions are already 128-multiples so it never fires.
        x_flat = jnp.pad(x_flat, ((0, 0), (0, 0), (0, hw_full - HW)))

    kernel = make_fused_kernel(C, x.dtype, compute_dtype, recompute_each_tile)

    out_flat = pl.pallas_call(
        kernel,
        out_shape=jax.ShapeDtypeStruct((B, C, hw_full), x.dtype),
        grid_spec=pltpu.PrefetchScalarGridSpec(
            num_scalar_prefetch=0,
            grid=(B, n_r),
            in_specs=[
                pl.BlockSpec((pl.Squeezed(), 1, 1), lambda b, r: (b, 0, 0)),    # time
                pl.BlockSpec((pl.Squeezed(), S, D), lambda b, r: (b, 0, 0)),    # text_embed (per batch)
                pl.BlockSpec((pl.Squeezed(), 1, S), lambda b, r: (b, 0, 0)),    # text_mask (per batch)
                pl.BlockSpec((1, E), lambda b, r: (0, 0)),                      # w_time
                pl.BlockSpec((1, E), lambda b, r: (0, 0)),                      # b_time
                pl.BlockSpec((D, E), lambda b, r: (0, 0)),                      # w_text
                pl.BlockSpec((E, 2 * C), lambda b, r: (0, 0)),                  # w_scale|w_shift
                pl.BlockSpec((pl.Squeezed(), C, THW), lambda b, r: (b, 0, r)),  # x tile
                pl.BlockSpec((C, C), lambda b, r: (0, 0)),                      # w_out
                pl.BlockSpec((C, 1), lambda b, r: (0, 0)),                      # b_out
            ],
            out_specs=pl.BlockSpec((pl.Squeezed(), C, THW), lambda b, r: (b, 0, r)),
            scratch_shapes=[pltpu.VMEM((C, 1), compute_dtype),    # 1+scale
                            pltpu.VMEM((C, 1), compute_dtype)],   # shift
        ),
        compiler_params=pltpu.CompilerParams(
            dimension_semantics=(("parallel", "parallel") if recompute_each_tile
                                 else ("parallel", "arbitrary")),
            vmem_limit_bytes=vmem_budget),
    )(time3, text_embed, mask3,
      params["w_time"], params["b_time"], params["w_text"], w_fs,
      x_flat, params["w_out"], params["b_out"])

    if hw_full != HW:
        out_flat = out_flat[:, :, :HW]
    return out_flat.reshape(B, C, H, W)


# ----------------------------------------------------------------------------
# Pure-JAX reference for correctness checking
# ----------------------------------------------------------------------------
def reference_forward(x, time, text_embed, text_mask, params):
    s = 0.008
    t = time.astype(jnp.float32)
    c = jnp.cos((t + s) / (1.0 + s) * (math.pi * 0.5))
    log_snr = -jnp.log(jnp.maximum(1.0 / (c * c) - 1.0, 1e-5))          # (B,)
    log_snr = log_snr.astype(x.dtype)                                   # type_as(x)

    h_t = log_snr[:, None] * params["w_time"] + params["b_time"]
    h_t = h_t * (1.0 / (1.0 + jnp.exp(-h_t)))

    m = text_mask.astype(jnp.float32)
    pooled = (text_embed * m[:, :, None]).sum(1) / jnp.maximum(
        m.sum(1, keepdims=True), 1.0)
    cond = h_t + pooled @ params["w_text"]
    scale = cond @ params["w_scale"]
    shift = cond @ params["w_shift"]

    h = x * (1.0 + scale[:, :, None, None]) + shift[:, :, None, None]
    out = jnp.einsum("oc,bchw->bohw", params["w_out"], h)
    out = out + params["b_out"].reshape(1, -1, 1, 1)
    return out.astype(x.dtype)


if __name__ == "__main__":
    B, C, H, W = 2, 4, 16, 16     # x: NCHW
    S, D, E = 8, 32, 32           # text seq len, text dim, cond embed dim

    key = jax.random.PRNGKey(0)
    keys = jax.random.split(key, 10)

    x = jax.random.normal(keys[0], (B, C, H, W), jnp.float32)
    time = jax.random.uniform(keys[1], (B,), jnp.float32)              # t in [0, 1)
    text_embed = jax.random.normal(keys[2], (B, S, D), jnp.float32)
    text_mask = jax.random.uniform(keys[3], (B, S)) > 0.3              # bool mask

    params = {
        "w_time": jax.random.normal(keys[4], (1, E), jnp.float32) * 0.1,
        "b_time": jax.random.normal(keys[5], (1, E), jnp.float32) * 0.1,
        "w_text": jax.random.normal(keys[6], (D, E), jnp.float32) / math.sqrt(D),
        "w_scale": jax.random.normal(keys[7], (E, C), jnp.float32) / math.sqrt(E),
        "w_shift": jax.random.normal(keys[8], (E, C), jnp.float32) / math.sqrt(E),
        "w_out": jax.random.normal(keys[9], (C, C), jnp.float32) / math.sqrt(C),
        "b_out": jnp.zeros((C, 1), jnp.float32),
    }

    out = continuous_ddpm_precond_forward(x, time, text_embed, text_mask, params)
    out = jax.block_until_ready(out)

    ref = reference_forward(x, time, text_embed, text_mask, params)
    assert out.shape == x.shape and out.dtype == x.dtype
    np.testing.assert_allclose(np.asarray(out), np.asarray(ref), rtol=1e-3, atol=1e-3)

    print("KERNEL_OK")
</pallas_src>

<mosaic_0001>
module attributes {stable_mosaic.version = 11 : i64} {
  func.func @kernel(%arg0: i32, %arg1: i32, %arg2: memref<1x1x1xf32, #tpu.memory_space<vmem>>, %arg3: memref<1x8x32xf32, #tpu.memory_space<vmem>>, %arg4: memref<1x1x8xf32, #tpu.memory_space<vmem>>, %arg5: memref<1x32xf32, #tpu.memory_space<vmem>>, %arg6: memref<1x32xf32, #tpu.memory_space<vmem>>, %arg7: memref<32x32xf32, #tpu.memory_space<vmem>>, %arg8: memref<32x8xf32, #tpu.memory_space<vmem>>, %arg9: memref<1x4x256xf32, #tpu.memory_space<vmem>>, %arg10: memref<4x4xf32, #tpu.memory_space<vmem>>, %arg11: memref<4x1xf32, #tpu.memory_space<vmem>>, %arg12: memref<1x4x256xf32, #tpu.memory_space<vmem>>, %arg13: memref<4x1xf32, #tpu.memory_space<vmem>>, %arg14: memref<4x1xf32, #tpu.memory_space<vmem>>) attributes {dimension_semantics = [#tpu.dimension_semantics<parallel>, #tpu.dimension_semantics<arbitrary>], iteration_bounds = array<i64: 2, 1>, scalar_prefetch = 0 : i64, scratch_operands = 2 : i64, tpu.core_type = #tpu.core_type<tc>, window_params = [{transform_indices = @transform_0, window_bounds = array<i64: 1, 1, 1>}, {transform_indices = @transform_1, window_bounds = array<i64: 1, 8, 32>}, {transform_indices = @transform_2, window_bounds = array<i64: 1, 1, 8>}, {pipeline_mode = #tpu.pipeline_mode<synchronous>, transform_indices = @transform_3, window_bounds = array<i64: 1, 32>}, {pipeline_mode = #tpu.pipeline_mode<synchronous>, transform_indices = @transform_4, window_bounds = array<i64: 1, 32>}, {pipeline_mode = #tpu.pipeline_mode<synchronous>, transform_indices = @transform_5, window_bounds = array<i64: 32, 32>}, {pipeline_mode = #tpu.pipeline_mode<synchronous>, transform_indices = @transform_6, window_bounds = array<i64: 32, 8>}, {transform_indices = @transform_7, window_bounds = array<i64: 1, 4, 256>}, {pipeline_mode = #tpu.pipeline_mode<synchronous>, transform_indices = @transform_8, window_bounds = array<i64: 4, 4>}, {pipeline_mode = #tpu.pipeline_mode<synchronous>, transform_indices = @transform_9, window_bounds = array<i64: 4, 1>}, {transform_indices = @transform_10, window_bounds = array<i64: 1, 4, 256>}]} {
    %c0_i32 = arith.constant 0 : i32
    %0 = arith.cmpi eq, %arg1, %c0_i32 : i32
    %1 = arith.extui %0 : i1 to i32
    %c0_i32_0 = arith.constant 0 : i32
    %2 = arith.cmpi ne, %1, %c0_i32_0 : i32
    scf.if %2 {
      %c0_14 = arith.constant 0 : index
      %c0_15 = arith.constant 0 : index
      %c0_16 = arith.constant 0 : index
      %42 = vector.load %arg2[%c0_14, %c0_15, %c0_16] : memref<1x1x1xf32, #tpu.memory_space<vmem>>, vector<1x1x1xf32>
      %43 = vector.shape_cast %42 : vector<1x1x1xf32> to vector<1x1xf32>
      %cst = arith.constant 8.000000e-03 : f32
      %44 = vector.broadcast %cst : f32 to vector<1x1xf32>
      %45 = arith.addf %43, %44 : vector<1x1xf32>
      %cst_17 = arith.constant 1.008000e+00 : f32
      %46 = vector.broadcast %cst_17 : f32 to vector<1x1xf32>
      %47 = arith.divf %45, %46 : vector<1x1xf32>
      %cst_18 = arith.constant 1.57079637 : f32
      %48 = vector.broadcast %cst_18 : f32 to vector<1x1xf32>
      %49 = arith.mulf %47, %48 : vector<1x1xf32>
      %50 = math.cos %49 : vector<1x1xf32>
      %51 = arith.mulf %50, %50 : vector<1x1xf32>
      %cst_19 = arith.constant 1.000000e+00 : f32
      %52 = vector.broadcast %cst_19 : f32 to vector<1x1xf32>
      %53 = arith.divf %52, %51 : vector<1x1xf32>
      %cst_20 = arith.constant 1.000000e+00 : f32
      %54 = vector.broadcast %cst_20 : f32 to vector<1x1xf32>
      %55 = arith.subf %53, %54 : vector<1x1xf32>
      %cst_21 = arith.constant 9.99999974E-6 : f32
      %56 = vector.broadcast %cst_21 : f32 to vector<1x1xf32>
      %57 = arith.maximumf %55, %56 : vector<1x1xf32>
      %58 = math.log %57 : vector<1x1xf32>
      %cst_22 = arith.constant 0.000000e+00 : f32
      %59 = vector.broadcast %cst_22 : f32 to vector<1x1xf32>
      %60 = arith.subf %59, %58 : vector<1x1xf32>
      %c0_23 = arith.constant 0 : index
      %c0_24 = arith.constant 0 : index
      %61 = vector.load %arg5[%c0_23, %c0_24] : memref<1x32xf32, #tpu.memory_space<vmem>>, vector<1x32xf32>
      %62 = vector.broadcast %60 : vector<1x1xf32> to vector<1x32xf32>
      %63 = arith.mulf %62, %61 : vector<1x32xf32>
      %c0_25 = arith.constant 0 : index
      %c0_26 = arith.constant 0 : index
      %64 = vector.load %arg6[%c0_25, %c0_26] : memref<1x32xf32, #tpu.memory_space<vmem>>, vector<1x32xf32>
      %65 = arith.addf %63, %64 : vector<1x32xf32>
      %cst_27 = arith.constant 0.000000e+00 : f32
      %66 = vector.broadcast %cst_27 : f32 to vector<1x32xf32>
      %67 = arith.subf %66, %65 : vector<1x32xf32>
      %68 = math.exp %67 : vector<1x32xf32>
      %cst_28 = arith.constant 1.000000e+00 : f32
      %69 = vector.broadcast %cst_28 : f32 to vector<1x32xf32>
      %70 = arith.addf %69, %68 : vector<1x32xf32>
      %cst_29 = arith.constant 1.000000e+00 : f32
      %71 = vector.broadcast %cst_29 : f32 to vector<1x32xf32>
      %72 = arith.divf %71, %70 : vector<1x32xf32>
      %73 = arith.mulf %65, %72 : vector<1x32xf32>
      %c0_30 = arith.constant 0 : index
      %c0_31 = arith.constant 0 : index
      %c0_32 = arith.constant 0 : index
      %74 = vector.load %arg4[%c0_30, %c0_31, %c0_32] : memref<1x1x8xf32, #tpu.memory_space<vmem>>, vector<1x1x8xf32>
      %75 = vector.shape_cast %74 : vector<1x1x8xf32> to vector<1x8xf32>
      %c0_33 = arith.constant 0 : index
      %c0_34 = arith.constant 0 : index
      %c0_35 = arith.constant 0 : index
      %76 = vector.load %arg3[%c0_33, %c0_34, %c0_35] : memref<1x8x32xf32, #tpu.memory_space<vmem>>, vector<1x8x32xf32>
      %77 = vector.shape_cast %76 : vector<1x8x32xf32> to vector<8x32xf32>
      %cst_36 = arith.constant dense<0.000000e+00> : vector<1x32xf32>
      %78 = tpu.matmul %75, %77, %cst_36 {dimension_numbers = #tpu.dot_dimension_numbers<[1], [0], [0], [1], [0, 0, 1, 1], [], []>} : vector<1x8xf32>, vector<8x32xf32>, vector<1x32xf32> -> vector<1x32xf32>
      %cst_37 = arith.constant dense<0.000000e+00> : vector<1xf32>
      %79 = vector.multi_reduction <add>, %75, %cst_37 [1] : vector<1x8xf32> to vector<1xf32>
      %80 = vector.shape_cast %79 : vector<1xf32> to vector<1x1xf32>
      %cst_38 = arith.constant 1.000000e+00 : f32
      %81 = vector.broadcast %cst_38 : f32 to vector<1x1xf32>
      %82 = arith.maximumf %80, %81 : vector<1x1xf32>
      %83 = vector.broadcast %82 : vector<1x1xf32> to vector<1x32xf32>
      %84 = arith.divf %78, %83 : vector<1x32xf32>
      %c0_39 = arith.constant 0 : index
      %c0_40 = arith.constant 0 : index
      %85 = vector.load %arg7[%c0_39, %c0_40] : memref<32x32xf32, #tpu.memory_space<vmem>>, vector<32x32xf32>
      %cst_41 = arith.constant dense<0.000000e+00> : vector<1x32xf32>
      %86 = tpu.matmul %84, %85, %cst_41 {dimension_numbers = #tpu.dot_dimension_numbers<[1], [0], [0], [1], [0, 0, 1, 1], [], []>} : vector<1x32xf32>, vector<32x32xf32>, vector<1x32xf32> -> vector<1x32xf32>
      %87 = arith.addf %73, %86 : vector<1x32xf32>
      %c0_42 = arith.constant 0 : index
      %c0_43 = arith.constant 0 : index
      %88 = vector.load %arg8[%c0_42, %c0_43] : memref<32x8xf32, #tpu.memory_space<vmem>>, vector<32x8xf32>
      %cst_44 = arith.constant dense<0.000000e+00> : vector<1x8xf32>
      %89 = tpu.matmul %87, %88, %cst_44 {dimension_numbers = #tpu.dot_dimension_numbers<[1], [0], [0], [1], [0, 0, 1, 1], [], []>} : vector<1x32xf32>, vector<32x8xf32>, vector<1x8xf32> -> vector<1x8xf32>
      %90 = vector.shape_cast %89 : vector<1x8xf32> to vector<1x8xf32>
      %91 = vector.broadcast %90 : vector<1x8xf32> to vector<4x8xf32>
      %92 = tpu.iota {dimensions = array<i32: 1>} : vector<4x8xi32>
      %93 = tpu.iota {dimensions = array<i32: 0>} : vector<4x8xi32>
      %94 = arith.cmpi eq, %92, %93 : vector<4x8xi32>
      %cst_45 = arith.constant 0.000000e+00 : f32
      %95 = vector.broadcast %cst_45 : f32 to vector<4x8xf32>
      %96 = arith.select %94, %91, %95 : vector<4x8xi1>, vector<4x8xf32>
      %cst_46 = arith.constant dense<0.000000e+00> : vector<4xf32>
      %97 = vector.multi_reduction <add>, %96, %cst_46 [1] : vector<4x8xf32> to vector<4xf32>
      %98 = vector.shape_cast %97 : vector<4xf32> to vector<4x1xf32>
      %cst_47 = arith.constant 1.000000e+00 : f32
      %99 = vector.broadcast %cst_47 : f32 to vector<4x1xf32>
      %100 = arith.addf %98, %99 : vector<4x1xf32>
      %c4_i32 = arith.constant 4 : i32
      %101 = vector.broadcast %c4_i32 : i32 to vector<4x8xi32>
      %102 = arith.addi %93, %101 : vector<4x8xi32>
      %103 = arith.cmpi eq, %92, %102 : vector<4x8xi32>
      %cst_48 = arith.constant 0.000000e+00 : f32
      %104 = vector.broadcast %cst_48 : f32 to vector<4x8xf32>
      %105 = arith.select %103, %91, %104 : vector<4x8xi1>, vector<4x8xf32>
      %cst_49 = arith.constant dense<0.000000e+00> : vector<4xf32>
      %106 = vector.multi_reduction <add>, %105, %cst_49 [1] : vector<4x8xf32> to vector<4xf32>
      %107 = vector.shape_cast %106 : vector<4xf32> to vector<4x1xf32>
      %c0_50 = arith.constant 0 : index
      %c0_51 = arith.constant 0 : index
      %108 = vector.load %arg13[%c0_50, %c0_51] : memref<4x1xf32, #tpu.memory_space<vmem>>, vector<4x1xf32>
      tpu.vector_store %arg13[%c0_50, %c0_51], %100 {strides = array<i32>} : memref<4x1xf32, #tpu.memory_space<vmem>>, vector<4x1xf32>,
      %c0_52 = arith.constant 0 : index
      %c0_53 = arith.constant 0 : index
      %109 = vector.load %arg14[%c0_52, %c0_53] : memref<4x1xf32, #tpu.memory_space<vmem>>, vector<4x1xf32>
      tpu.vector_store %arg14[%c0_52, %c0_53], %107 {strides = array<i32>} : memref<4x1xf32, #tpu.memory_space<vmem>>, vector<4x1xf32>,
    } else {
    }
    %c0 = arith.constant 0 : index
    %c0_1 = arith.constant 0 : index
    %c0_2 = arith.constant 0 : index
    %3 = vector.load %arg9[%c0, %c0_1, %c0_2] : memref<1x4x256xf32, #tpu.memory_space<vmem>>, vector<1x4x256xf32>
    %4 = vector.shape_cast %3 : vector<1x4x256xf32> to vector<4x256xf32>
    %c0_3 = arith.constant 0 : index
    %c0_4 = arith.constant 0 : index
    %5 = vector.load %arg13[%c0_3, %c0_4] : memref<4x1xf32, #tpu.memory_space<vmem>>, vector<4x1xf32>
    %6 = vector.broadcast %5 : vector<4x1xf32> to vector<4x256xf32>
    %7 = arith.mulf %4, %6 : vector<4x256xf32>
    %c0_5 = arith.constant 0 : index
    %c0_6 = arith.constant 0 : index
    %8 = vector.load %arg14[%c0_5, %c0_6] : memref<4x1xf32, #tpu.memory_space<vmem>>, vector<4x1xf32>
    %9 = vector.broadcast %8 : vector<4x1xf32> to vector<4x256xf32>
    %10 = arith.addf %7, %9 : vector<4x256xf32>
    %c0_7 = arith.constant 0 : index
    %c0_8 = arith.constant 0 : index
    %11 = vector.load %arg10[%c0_7, %c0_8] : memref<4x4xf32, #tpu.memory_space<vmem>>, vector<4x4xf32>
    %c0_9 = arith.constant 0 : index
    %c0_10 = arith.constant 0 : index
    %12 = vector.load %arg11[%c0_9, %c0_10] : memref<4x1xf32, #tpu.memory_space<vmem>>, vector<4x1xf32>
    %13 = vector.shape_cast %12 : vector<4x1xf32> to vector<4x1xf32>
    %14 = vector.broadcast %13 : vector<4x1xf32> to vector<4x256xf32>
    %15 = vector.extract_strided_slice %11 {offsets = [0, 0], sizes = [4, 1], strides = [1, 1]} : vector<4x4xf32> to vector<4x1xf32>
    %16 = vector.extract_strided_slice %10 {offsets = [0, 0], sizes = [1, 256], strides = [1, 1]} : vector<4x256xf32> to vector<1x256xf32>
    %17 = vector.broadcast %15 : vector<4x1xf32> to vector<4x256xf32>
    %18 = vector.broadcast %16 : vector<1x256xf32> to vector<4x256xf32>
    %19 = arith.mulf %17, %18 : vector<4x256xf32>
    %20 = arith.addf %14, %19 : vector<4x256xf32>
    %21 = vector.extract_strided_slice %11 {offsets = [0, 1], sizes = [4, 1], strides = [1, 1]} : vector<4x4xf32> to vector<4x1xf32>
    %22 = vector.extract_strided_slice %10 {offsets = [1, 0], sizes = [1, 256], strides = [1, 1]} : vector<4x256xf32> to vector<1x256xf32>
    %23 = vector.broadcast %21 : vector<4x1xf32> to vector<4x256xf32>
    %24 = vector.broadcast %22 : vector<1x256xf32> to vector<4x256xf32>
    %25 = arith.mulf %23, %24 : vector<4x256xf32>
    %26 = arith.addf %20, %25 : vector<4x256xf32>
    %27 = vector.extract_strided_slice %11 {offsets = [0, 2], sizes = [4, 1], strides = [1, 1]} : vector<4x4xf32> to vector<4x1xf32>
    %28 = vector.extract_strided_slice %10 {offsets = [2, 0], sizes = [1, 256], strides = [1, 1]} : vector<4x256xf32> to vector<1x256xf32>
    %29 = vector.broadcast %27 : vector<4x1xf32> to vector<4x256xf32>
    %30 = vector.broadcast %28 : vector<1x256xf32> to vector<4x256xf32>
    %31 = arith.mulf %29, %30 : vector<4x256xf32>
    %32 = arith.addf %26, %31 : vector<4x256xf32>
    %33 = vector.extract_strided_slice %11 {offsets = [0, 3], sizes = [4, 1], strides = [1, 1]} : vector<4x4xf32> to vector<4x1xf32>
    %34 = vector.extract_strided_slice %10 {offsets = [3, 0], sizes = [1, 256], strides = [1, 1]} : vector<4x256xf32> to vector<1x256xf32>
    %35 = vector.broadcast %33 : vector<4x1xf32> to vector<4x256xf32>
    %36 = vector.broadcast %34 : vector<1x256xf32> to vector<4x256xf32>
    %37 = arith.mulf %35, %36 : vector<4x256xf32>
    %38 = arith.addf %32, %37 : vector<4x256xf32>
    %c0_11 = arith.constant 0 : index
    %c0_12 = arith.constant 0 : index
    %c0_13 = arith.constant 0 : index
    %39 = vector.load %arg12[%c0_11, %c0_12, %c0_13] : memref<1x4x256xf32, #tpu.memory_space<vmem>>, vector<1x4x256xf32>
    %40 = vector.shape_cast %39 : vector<1x4x256xf32> to vector<4x256xf32>
    %41 = vector.shape_cast %38 : vector<4x256xf32> to vector<1x4x256xf32>
    tpu.vector_store %arg12[%c0_11, %c0_12, %c0_13], %41 {strides = array<i32>} : memref<1x4x256xf32, #tpu.memory_space<vmem>>, vector<1x4x256xf32>,
    return
  }
  func.func @transform_0(%arg0: i32, %arg1: i32) -> (i32, i32, i32) {
    %c0_i32 = arith.constant 0 : i32
    %c0_i32_0 = arith.constant 0 : i32
    %c0_i32_1 = arith.constant 0 : i32
    return %arg0, %c0_i32, %c0_i32_0 : i32, i32, i32
  }
  func.func @transform_1(%arg0: i32, %arg1: i32) -> (i32, i32, i32) {
    %c0_i32 = arith.constant 0 : i32
    %c0_i32_0 = arith.constant 0 : i32
    %c0_i32_1 = arith.constant 0 : i32
    return %arg0, %c0_i32, %c0_i32_0 : i32, i32, i32
  }
  func.func @transform_2(%arg0: i32, %arg1: i32) -> (i32, i32, i32) {
    %c0_i32 = arith.constant 0 : i32
    %c0_i32_0 = arith.constant 0 : i32
    %c0_i32_1 = arith.constant 0 : i32
    return %arg0, %c0_i32, %c0_i32_0 : i32, i32, i32
  }
  func.func @transform_3(%arg0: i32, %arg1: i32) -> (i32, i32) {
    %c0_i32 = arith.constant 0 : i32
    %c0_i32_0 = arith.constant 0 : i32
    %c0_i32_1 = arith.constant 0 : i32
    return %c0_i32, %c0_i32_0 : i32, i32
  }
  func.func @transform_4(%arg0: i32, %arg1: i32) -> (i32, i32) {
    %c0_i32 = arith.constant 0 : i32
    %c0_i32_0 = arith.constant 0 : i32
    %c0_i32_1 = arith.constant 0 : i32
    return %c0_i32, %c0_i32_0 : i32, i32
  }
  func.func @transform_5(%arg0: i32, %arg1: i32) -> (i32, i32) {
    %c0_i32 = arith.constant 0 : i32
    %c0_i32_0 = arith.constant 0 : i32
    %c0_i32_1 = arith.constant 0 : i32
    return %c0_i32, %c0_i32_0 : i32, i32
  }
  func.func @transform_6(%arg0: i32, %arg1: i32) -> (i32, i32) {
    %c0_i32 = arith.constant 0 : i32
    %c0_i32_0 = arith.constant 0 : i32
    %c0_i32_1 = arith.constant 0 : i32
    return %c0_i32, %c0_i32_0 : i32, i32
  }
  func.func @transform_7(%arg0: i32, %arg1: i32) -> (i32, i32, i32) {
    %c0_i32 = arith.constant 0 : i32
    %c0_i32_0 = arith.constant 0 : i32
    return %arg0, %c0_i32, %arg1 : i32, i32, i32
  }
  func.func @transform_8(%arg0: i32, %arg1: i32) -> (i32, i32) {
    %c0_i32 = arith.constant 0 : i32
    %c0_i32_0 = arith.constant 0 : i32
    %c0_i32_1 = arith.constant 0 : i32
    return %c0_i32, %c0_i32_0 : i32, i32
  }
  func.func @transform_9(%arg0: i32, %arg1: i32) -> (i32, i32) {
    %c0_i32 = arith.constant 0 : i32
    %c0_i32_0 = arith.constant 0 : i32
    %c0_i32_1 = arith.constant 0 : i32
    return %c0_i32, %c0_i32_0 : i32, i32
  }
  func.func @transform_10(%arg0: i32, %arg1: i32) -> (i32, i32, i32) {
    %c0_i32 = arith.constant 0 : i32
    %c0_i32_0 = arith.constant 0 : i32
    return %arg0, %c0_i32, %arg1 : i32, i32, i32
  }
}

</mosaic_0001>

<llo_original>
// kernel: tpu_custom_call.1
$region0: #{tpu_custom_call.1}
  #allocation0 [shape = 'u32[]', space=smem, size = 0x4, offset = 0x4, fixed_abs, tag = 'smem constant byte address 0x4 - core index']
  #allocation1 [shape = 'u32[144,128]{1,0:T(1,128)}', space=vmem, size = 0x12000, scoped, tag = 'internal scratch']
  #allocation2 [shape = 'f32[4,1]{1,0:T(4,128)}', space=vmem, size = 0x800, scoped, tag = 'scratch operand']
  #allocation3 [shape = 'f32[4,1]{1,0:T(4,128)}', space=vmem, size = 0x800, scoped, tag = 'scratch operand']
  %s0 = inlined_call_operand.vmem [shape: f32[2,1,1], index: 0, kind: input, shape index: {}]
  %s1 = inlined_call_operand.vmem [shape: f32[2,8,32], index: 1, kind: input, shape index: {}]
  %s2 = inlined_call_operand.vmem [shape: f32[2,1,8], index: 2, kind: input, shape index: {}]
  %s3 = inlined_call_operand.vmem [shape: f32[1,32], index: 3, kind: input, shape index: {}]
  %s4 = inlined_call_operand.hbm [shape: f32[1,32], index: 4, kind: input, shape index: {}]
  %s5 = inlined_call_operand.vmem [shape: f32[32,32], index: 5, kind: input, shape index: {}]
  %s6 = inlined_call_operand.vmem [shape: f32[32,8], index: 6, kind: input, shape index: {}]
  %s7 = inlined_call_operand.vmem [shape: f32[2,4,256], index: 7, kind: input, shape index: {}]
  %s8 = inlined_call_operand.vmem [shape: f32[4,4], index: 8, kind: input, shape index: {}]
  %s9 = inlined_call_operand.vmem [shape: f32[4,1], index: 9, kind: input, shape index: {}]
  %s10 = inlined_call_operand.hbm [shape: f32[2,4,256], index: 10, kind: output, shape index: {}]
  %s11 = sld [smem:[#allocation0]]
  $region81: #{tpu_custom_call.1} parent=0
    _
  %s13 = ssub.s32 1, %s11
  %s14 = scalar_select 0, %s13, %s11
  $region1: #{tpu_custom_call.1} parent=0
    #allocation4 [shape = 'u8[512]{0}', space=vmem, size = 0x400, scoped, tag = 'input window, operand 4, single buffered']
    #allocation5 [shape = 's32[2]{0}', space=sflag, size = 0x8, scoped, tag = 'scoped memory for tpu_custom_call.1']
    #allocation6 [shape = 's32[2]{0}', space=sflag, size = 0x8, scoped, tag = 'scoped memory for tpu_custom_call.1']
    #allocation7 [shape = 'u8[8192]{0}', space=vmem, size = 0x2000, scoped, tag = 'output window, operand 0']
    %15 = vsyncpa [#allocation5], 0
    %16 = vsyncpa [#allocation6], 0
    %s17 = scalar_lea.sflag [#allocation6], 1
    %18 = vsyncpa %s17, 0
    loop: start=0, step=1, limit=4
    $region2: #{tpu_custom_call.1} parent=1 // loop_pre_header
      _
    $region3: #{tpu_custom_call.1} parent=1 // loop_header
      %s20 = sphi 0, %s24
      %p21 = scmp.ge.s32.totalorder %s20, 4
      %s27 = sphi 0, %s39
      %s28 = sphi 0, %s35
      %s29 = sphi 0, %s27
      %s30 = sphi 0, %s28
      %s31 = sphi 0, %s29
      %s32 = sphi 0, %s30
      %s42 = sphi 0, %s44
      %s45 = sphi 0, %s42
      %s46 = sphi 0, %s45
      %s62 = sphi 0, %s46
      %s68 = sphi 0, %s70
      %s71 = sphi 0, %s68
      %s72 = sphi 0, %s71
      %s88 = sphi 0, %s72
      %s94 = sphi 0, %s96
      %s97 = sphi 0, %s94
      %s98 = sphi 0, %s97
      %s114 = sphi 0, %s98
      %s118 = sphi 0, %s118
      %s120 = sphi 0, %s118
      %s121 = sphi 0, %s120
      %s135 = sphi 0, %s121
      %s139 = sphi 0, %s139
      %s141 = sphi 0, %s139
      %s142 = sphi 0, %s141
      %s156 = sphi 0, %s142
      %s160 = sphi 0, %s160
      %s162 = sphi 0, %s160
      %s163 = sphi 0, %s162
      %s177 = sphi 0, %s163
      %s181 = sphi 0, %s181
      %s183 = sphi 0, %s181
      %s184 = sphi 0, %s183
      %s198 = sphi 0, %s184
      %s206 = sphi 0, %s208
      %s209 = sphi 0, %s206
      %s210 = sphi 0, %s209
      %s226 = sphi 0, %s210
      %s230 = sphi 0, %s230
      %s232 = sphi 0, %s230
      %s233 = sphi 0, %s232
      %s247 = sphi 0, %s233
      %s251 = sphi 0, %s251
      %s253 = sphi 0, %s251
      %s254 = sphi 0, %s253
      %s268 = sphi 0, %s254
      %s276 = sphi 0, %s278
      %s279 = sphi 0, %s276
      %s280 = sphi 0, %s279
      %s296 = sphi 0, %s280
    $region4: #{tpu_custom_call.1} parent=1 // loop_header_branch
      %23 = sbr.rel (%p21) target = $region8
    $region5: #{tpu_custom_call.1} parent=1 // loop_body
      %s25 = ssub.s32 %s20, 1
      %s26 = ssub.s32 %s20, 2
      %s33 = sadd.s32 1, %s28
      %p34 = scmp.ge.s32.totalorder %s33, 1
      %s35 = scalar_select %p34, 0, %s33
      %s36 = sadd.s32 1, %s27
      %s37 = scalar_select %p34, %s36, %s27
      %p38 = scmp.ge.s32.totalorder %s37, 2
      %s39 = scalar_select %p38, 0, %s37
      %s40 = ssub.s32 %s27, %s39
      %p41 = scmp.eq.s32.totalorder %s40, 0
      %s43 = sadd.s32 %s42, 1
      %s44 = scalar_select %p41, %s42, %s43
      %p47 = pneg %p41
      %p48 = scmp.eq.s32.totalorder %s20, 1
      %p49 = por %p47, %p48
      %p50 = scmp.ne.s32.totalorder %s42, %s45
      %p51 = scmp.eq.s32.totalorder %s20, 0
      %p52 = por %p50, %p51
      %p53 = scmp.ne.s32.totalorder %s42, %s45
      %p54 = scmp.eq.s32.totalorder %s25, 1
      %p55 = por %p53, %p54
      %p56 = scmp.ne.s32.totalorder %s45, %s46
      %p57 = scmp.eq.s32.totalorder %s25, 0
      %p58 = por %p56, %p57
      %p59 = scmp.ne.s32.totalorder %s45, %s46
      %p60 = scmp.eq.s32.totalorder %s26, 1
      %p61 = por %p59, %p60
      %p63 = scmp.ne.s32.totalorder %s46, %s62
      %p64 = scmp.eq.s32.totalorder %s26, 0
      %p65 = por %p63, %p64
      %s66 = ssub.s32 %s27, %s39
      %p67 = scmp.eq.s32.totalorder %s66, 0
      %s69 = sadd.s32 %s68, 1
      %s70 = scalar_select %p67, %s68, %s69
      %p73 = pneg %p67
      %p74 = scmp.eq.s32.totalorder %s20, 1
      %p75 = por %p73, %p74
      %p76 = scmp.ne.s32.totalorder %s68, %s71
      %p77 = scmp.eq.s32.totalorder %s20, 0
      %p78 = por %p76, %p77
      %p79 = scmp.ne.s32.totalorder %s68, %s71
      %p80 = scmp.eq.s32.totalorder %s25, 1
      %p81 = por %p79, %p80
      %p82 = scmp.ne.s32.totalorder %s71, %s72
      %p83 = scmp.eq.s32.totalorder %s25, 0
      %p84 = por %p82, %p83
      %p85 = scmp.ne.s32.totalorder %s71, %s72
      %p86 = scmp.eq.s32.totalorder %s26, 1
      %p87 = por %p85, %p86
      %p89 = scmp.ne.s32.totalorder %s72, %s88
      %p90 = scmp.eq.s32.totalorder %s26, 0
      %p91 = por %p89, %p90
      %s92 = ssub.s32 %s27, %s39
      %p93 = scmp.eq.s32.totalorder %s92, 0
      %s95 = sadd.s32 %s94, 1
      %s96 = scalar_select %p93, %s94, %s95
      %p99 = pneg %p93
      %p100 = scmp.eq.s32.totalorder %s20, 1
      %p101 = por %p99, %p100
      %p102 = scmp.ne.s32.totalorder %s94, %s97
      %p103 = scmp.eq.s32.totalorder %s20, 0
      %p104 = por %p102, %p103
      %p105 = scmp.ne.s32.totalorder %s94, %s97
      %p106 = scmp.eq.s32.totalorder %s25, 1
      %p107 = por %p105, %p106
      %p108 = scmp.ne.s32.totalorder %s97, %s98
      %p109 = scmp.eq.s32.totalorder %s25, 0
      %p110 = por %p108, %p109
      %p111 = scmp.ne.s32.totalorder %s97, %s98
      %p112 = scmp.eq.s32.totalorder %s26, 1
      %p113 = por %p111, %p112
      %p115 = scmp.ne.s32.totalorder %s98, %s114
      %p116 = scmp.eq.s32.totalorder %s26, 0
      %p117 = por %p115, %p116
      %s119 = sadd.s32 %s118, 1
      %p122 = scmp.eq.s32.totalorder %s20, 1
      %p123 = scmp.ne.s32.totalorder %s118, %s120
      %p124 = scmp.eq.s32.totalorder %s20, 0
      %p125 = por %p123, %p124
      %p126 = scmp.ne.s32.totalorder %s118, %s120
      %p127 = scmp.eq.s32.totalorder %s25, 1
      %p128 = por %p126, %p127
      %p129 = scmp.ne.s32.totalorder %s120, %s121
      %p130 = scmp.eq.s32.totalorder %s25, 0
      %p131 = por %p129, %p130
      %p132 = scmp.ne.s32.totalorder %s120, %s121
      %p133 = scmp.eq.s32.totalorder %s26, 1
      %p134 = por %p132, %p133
      %p136 = scmp.ne.s32.totalorder %s121, %s135
      %p137 = scmp.eq.s32.totalorder %s26, 0
      %p138 = por %p136, %p137
      %s140 = sadd.s32 %s139, 1
      %p143 = scmp.eq.s32.totalorder %s20, 1
      %p144 = scmp.ne.s32.totalorder %s139, %s141
      %p145 = scmp.eq.s32.totalorder %s20, 0
      %p146 = por %p144, %p145
      %p147 = scmp.ne.s32.totalorder %s139, %s141
      %p148 = scmp.eq.s32.totalorder %s25, 1
      %p149 = por %p147, %p148
      %p150 = scmp.ne.s32.totalorder %s141, %s142
      %p151 = scmp.eq.s32.totalorder %s25, 0
      %p152 = por %p150, %p151
      %p153 = scmp.ne.s32.totalorder %s141, %s142
      %p154 = scmp.eq.s32.totalorder %s26, 1
      %p155 = por %p153, %p154
      %p157 = scmp.ne.s32.totalorder %s142, %s156
      %p158 = scmp.eq.s32.totalorder %s26, 0
      %p159 = por %p157, %p158
      %s161 = sadd.s32 %s160, 1
      %p164 = scmp.eq.s32.totalorder %s20, 1
      %p165 = scmp.ne.s32.totalorder %s160, %s162
      %p166 = scmp.eq.s32.totalorder %s20, 0
      %p167 = por %p165, %p166
      %p168 = scmp.ne.s32.totalorder %s160, %s162
      %p169 = scmp.eq.s32.totalorder %s25, 1
      %p170 = por %p168, %p169
      %p171 = scmp.ne.s32.totalorder %s162, %s163
      %p172 = scmp.eq.s32.totalorder %s25, 0
      %p173 = por %p171, %p172
      %p174 = scmp.ne.s32.totalorder %s162, %s163
      %p175 = scmp.eq.s32.totalorder %s26, 1
      %p176 = por %p174, %p175
      %p178 = scmp.ne.s32.totalorder %s163, %s177
      %p179 = scmp.eq.s32.totalorder %s26, 0
      %p180 = por %p178, %p179
      %s182 = sadd.s32 %s181, 1
      %p185 = scmp.eq.s32.totalorder %s20, 1
      %p186 = scmp.ne.s32.totalorder %s181, %s183
      %p187 = scmp.eq.s32.totalorder %s20, 0
      %p188 = por %p186, %p187
      %p189 = scmp.ne.s32.totalorder %s181, %s183
      %p190 = scmp.eq.s32.totalorder %s25, 1
      %p191 = por %p189, %p190
      %p192 = scmp.ne.s32.totalorder %s183, %s184
      %p193 = scmp.eq.s32.totalorder %s25, 0
      %p194 = por %p192, %p193
      %p195 = scmp.ne.s32.totalorder %s183, %s184
      %p196 = scmp.eq.s32.totalorder %s26, 1
      %p197 = por %p195, %p196
      %p199 = scmp.ne.s32.totalorder %s184, %s198
      %p200 = scmp.eq.s32.totalorder %s26, 0
      %p201 = por %p199, %p200
      %s202 = ssub.s32 %s27, %s39
      %s203 = ssub.s32 %s28, %s35
      %s204 = sor.u32 %s202, %s203
      %p205 = scmp.eq.s32.totalorder %s204, 0
      %s207 = sadd.s32 %s206, 1
      %s208 = scalar_select %p205, %s206, %s207
      %p211 = pneg %p205
      %p212 = scmp.eq.s32.totalorder %s20, 1
      %p213 = por %p211, %p212
      %p214 = scmp.ne.s32.totalorder %s206, %s209
      %p215 = scmp.eq.s32.totalorder %s20, 0
      %p216 = por %p214, %p215
      %p217 = scmp.ne.s32.totalorder %s206, %s209
      %p218 = scmp.eq.s32.totalorder %s25, 1
      %p219 = por %p217, %p218
      %p220 = scmp.ne.s32.totalorder %s209, %s210
      %p221 = scmp.eq.s32.totalorder %s25, 0
      %p222 = por %p220, %p221
      %p223 = scmp.ne.s32.totalorder %s209, %s210
      %p224 = scmp.eq.s32.totalorder %s26, 1
      %p225 = por %p223, %p224
      %p227 = scmp.ne.s32.totalorder %s210, %s226
      %p228 = scmp.eq.s32.totalorder %s26, 0
      %p229 = por %p227, %p228
      %s231 = sadd.s32 %s230, 1
      %p234 = scmp.eq.s32.totalorder %s20, 1
      %p235 = scmp.ne.s32.totalorder %s230, %s232
      %p236 = scmp.eq.s32.totalorder %s20, 0
      %p237 = por %p235, %p236
      %p238 = scmp.ne.s32.totalorder %s230, %s232
      %p239 = scmp.eq.s32.totalorder %s25, 1
      %p240 = por %p238, %p239
      %p241 = scmp.ne.s32.totalorder %s232, %s233
      %p242 = scmp.eq.s32.totalorder %s25, 0
      %p243 = por %p241, %p242
      %p244 = scmp.ne.s32.totalorder %s232, %s233
      %p245 = scmp.eq.s32.totalorder %s26, 1
      %p246 = por %p244, %p245
      %p248 = scmp.ne.s32.totalorder %s233, %s247
      %p249 = scmp.eq.s32.totalorder %s26, 0
      %p250 = por %p248, %p249
      %s252 = sadd.s32 %s251, 1
      %p255 = scmp.eq.s32.totalorder %s20, 1
      %p256 = scmp.ne.s32.totalorder %s251, %s253
      %p257 = scmp.eq.s32.totalorder %s20, 0
      %p258 = por %p256, %p257
      %p259 = scmp.ne.s32.totalorder %s251, %s253
      %p260 = scmp.eq.s32.totalorder %s25, 1
      %p261 = por %p259, %p260
      %p262 = scmp.ne.s32.totalorder %s253, %s254
      %p263 = scmp.eq.s32.totalorder %s25, 0
      %p264 = por %p262, %p263
      %p265 = scmp.ne.s32.totalorder %s253, %s254
      %p266 = scmp.eq.s32.totalorder %s26, 1
      %p267 = por %p265, %p266
      %p269 = scmp.ne.s32.totalorder %s254, %s268
      %p270 = scmp.eq.s32.totalorder %s26, 0
      %p271 = por %p269, %p270
      %s272 = ssub.s32 %s27, %s39
      %s273 = ssub.s32 %s28, %s35
      %s274 = sor.u32 %s272, %s273
      %p275 = scmp.eq.s32.totalorder %s274, 0
      %s277 = sadd.s32 %s276, 1
      %s278 = scalar_select %p275, %s276, %s277
      %p281 = pneg %p275
      %p282 = scmp.eq.s32.totalorder %s20, 1
      %p283 = por %p281, %p282
      %p284 = scmp.ne.s32.totalorder %s276, %s279
      %p285 = scmp.eq.s32.totalorder %s20, 0
      %p286 = por %p284, %p285
      %p287 = scmp.ne.s32.totalorder %s276, %s279
      %p288 = scmp.eq.s32.totalorder %s25, 1
      %p289 = por %p287, %p288
      %p290 = scmp.ne.s32.totalorder %s279, %s280
      %p291 = scmp.eq.s32.totalorder %s25, 0
      %p292 = por %p290, %p291
      %p293 = scmp.ne.s32.totalorder %s279, %s280
      %p294 = scmp.eq.s32.totalorder %s26, 1
      %p295 = por %p293, %p294
      %p297 = scmp.ne.s32.totalorder %s280, %s296
      %p298 = scmp.eq.s32.totalorder %s26, 0
      %p299 = por %p297, %p298
      %p300 = scmp.le.s32.totalorder 1, %s20
      %p301 = scmp.lt.s32.totalorder %s20, 3
      %p302 = pnand %p300, %p301
      %p303 = pneg %p302
      // Predicated region
      $region9: #{tpu_custom_call.1} parent=5 // pred_check
        _
      $region10: #{tpu_custom_call.1} parent=5 // pred_check_branch
        %305 = sbr.rel (%p302) target = $region12
      $region11: #{tpu_custom_call.1} parent=5 // pred_region
        %s306 = ssub.s32 %s20, 1
        // Predicated region
        $region13: #{tpu_custom_call.1} parent=11 // pred_check
          %p307 = pneg %p131
        $region14: #{tpu_custom_call.1} parent=11 // pred_check_branch
          %309 = sbr.rel (%p307) target = $region16
        $region15: #{tpu_custom_call.1} parent=11 // pred_region
          _
        $region16: #{tpu_custom_call.1} parent=11 // pred_fallthru
          _
        // Predicated region
        $region17: #{tpu_custom_call.1} parent=11 // pred_check
          %p310 = pneg %p152
        $region18: #{tpu_custom_call.1} parent=11 // pred_check_branch
          %312 = sbr.rel (%p310) target = $region20
        $region19: #{tpu_custom_call.1} parent=11 // pred_region
          %s314 = ssub.s32 16, 16
          %315 = vsyncadd [#allocation5], %s314
          %s317 = sshll.u32 [#allocation4], 4
          %s318 = int_to_ptr.vmem [resolvable:$true] %s317
          %320 = dma.hbm_to_vmem [thread:$0]  %s4, 16, %s318, [#allocation5]
        $region20: #{tpu_custom_call.1} parent=11 // pred_fallthru
          _
        // Predicated region
        $region21: #{tpu_custom_call.1} parent=11 // pred_check
          %p321 = pneg %p173
        $region22: #{tpu_custom_call.1} parent=11 // pred_check_branch
          %323 = sbr.rel (%p321) target = $region24
        $region23: #{tpu_custom_call.1} parent=11 // pred_region
          _
        $region24: #{tpu_custom_call.1} parent=11 // pred_fallthru
          _
        // Predicated region
        $region25: #{tpu_custom_call.1} parent=11 // pred_check
          %p324 = pneg %p194
        $region26: #{tpu_custom_call.1} parent=11 // pred_check_branch
          %326 = sbr.rel (%p324) target = $region28
        $region27: #{tpu_custom_call.1} parent=11 // pred_region
          _
        $region28: #{tpu_custom_call.1} parent=11 // pred_fallthru
          _
        // Predicated region
        $region29: #{tpu_custom_call.1} parent=11 // pred_check
          %p327 = pneg %p243
        $region30: #{tpu_custom_call.1} parent=11 // pred_check_branch
          %329 = sbr.rel (%p327) target = $region32
        $region31: #{tpu_custom_call.1} parent=11 // pred_region
          _
        $region32: #{tpu_custom_call.1} parent=11 // pred_fallthru
          _
        // Predicated region
        $region33: #{tpu_custom_call.1} parent=11 // pred_check
          %p330 = pneg %p264
        $region34: #{tpu_custom_call.1} parent=11 // pred_check_branch
          %332 = sbr.rel (%p330) target = $region36
        $region35: #{tpu_custom_call.1} parent=11 // pred_region
          _
        $region36: #{tpu_custom_call.1} parent=11 // pred_fallthru
          _
      $region12: #{tpu_custom_call.1} parent=5 // pred_fallthru
        _
      %p333 = scmp.lt.s32.totalorder %s20, 2
      // Predicated region
      $region37: #{tpu_custom_call.1} parent=5 // pred_check
        %p334 = pneg %p333
      $region38: #{tpu_custom_call.1} parent=5 // pred_check_branch
        %336 = sbr.rel (%p334) target = $region40
      $region39: #{tpu_custom_call.1} parent=5 // pred_region
        // Predicated region
        $region41: #{tpu_custom_call.1} parent=39 // pred_check
          %p337 = pneg %p52
        $region42: #{tpu_custom_call.1} parent=39 // pred_check_branch
          %339 = sbr.rel (%p337) target = $region44
        $region43: #{tpu_custom_call.1} parent=39 // pred_region
          %p340 = scmp.lt.s32.totalorder %s27, 1
          %s341 = scalar_select %p340, %s27, 1
          %s342 = scalar_lea.vmem %s0, %s341
        $region44: #{tpu_custom_call.1} parent=39 // pred_fallthru
          _
        // Predicated region
        $region45: #{tpu_custom_call.1} parent=39 // pred_check
          %p343 = pneg %p78
        $region46: #{tpu_custom_call.1} parent=39 // pred_check_branch
          %345 = sbr.rel (%p343) target = $region48
        $region47: #{tpu_custom_call.1} parent=39 // pred_region
          %p346 = scmp.lt.s32.totalorder %s27, 1
          %s347 = scalar_select %p346, %s27, 1
          %s348 = smul.addr %s347, 8
          %s349 = scalar_lea.vmem %s1, %s348
        $region48: #{tpu_custom_call.1} parent=39 // pred_fallthru
          _
        // Predicated region
        $region49: #{tpu_custom_call.1} parent=39 // pred_check
          %p350 = pneg %p104
        $region50: #{tpu_custom_call.1} parent=39 // pred_check_branch
          %352 = sbr.rel (%p350) target = $region52
        $region51: #{tpu_custom_call.1} parent=39 // pred_region
          %p353 = scmp.lt.s32.totalorder %s27, 1
          %s354 = scalar_select %p353, %s27, 1
          %s355 = scalar_lea.vmem %s2, %s354
        $region52: #{tpu_custom_call.1} parent=39 // pred_fallthru
          _
        // Predicated region
        $region53: #{tpu_custom_call.1} parent=39 // pred_check
          %p356 = pneg %p216
        $region54: #{tpu_custom_call.1} parent=39 // pred_check_branch
          %358 = sbr.rel (%p356) target = $region56
        $region55: #{tpu_custom_call.1} parent=39 // pred_region
          %s359 = smul.u32 2, %s28
          %p360 = scmp.lt.s32.totalorder %s27, 1
          %s361 = scalar_select %p360, %s27, 1
          %p362 = scmp.lt.s32.totalorder %s359, 1
          %s363 = scalar_select %p362, %s359, 1
          %s364 = smul.addr %s361, 2
          %s365 = sadd.s32 %s363, %s364
          %s366 = smul.addr %s365, 4
          %s367 = scalar_lea.vmem %s7, %s366
          %s368 = smul.u32 2, %s28
        $region56: #{tpu_custom_call.1} parent=39 // pred_fallthru
          _
      $region40: #{tpu_custom_call.1} parent=5 // pred_fallthru
        _
      %p369 = scmp.le.s32.totalorder 1, %s20
      %p370 = scmp.lt.s32.totalorder %s20, 3
      %p371 = pnand %p369, %p370
      %p372 = pneg %p371
      // Predicated region
      $region57: #{tpu_custom_call.1} parent=5 // pred_check
        _
      $region58: #{tpu_custom_call.1} parent=5 // pred_check_branch
        %374 = sbr.rel (%p371) target = $region60
      $region59: #{tpu_custom_call.1} parent=5 // pred_region
        %s375 = ssub.s32 %s20, 1
        // Predicated region
        $region61: #{tpu_custom_call.1} parent=59 // pred_check
          %p376 = pneg %p152
        $region62: #{tpu_custom_call.1} parent=59 // pred_check_branch
          %378 = sbr.rel (%p376) target = $region64
        $region63: #{tpu_custom_call.1} parent=59 // pred_region
          %379 = dma.done [#allocation5], 16
        $region64: #{tpu_custom_call.1} parent=59 // pred_fallthru
          _
        %p380 = scmp.lt.s32.totalorder %s29, 1
        %s381 = scalar_select %p380, %s29, 1
        %s382 = scalar_lea.vmem %s0, %s381
        %p383 = pneg %p58
        %p384 = pneg %p55
        %p385 = scmp.lt.s32.totalorder %s29, 1
        %s386 = scalar_select %p385, %s29, 1
        %s387 = smul.addr %s386, 8
        %s388 = scalar_lea.vmem %s1, %s387
        %p389 = pneg %p84
        %p390 = pneg %p81
        %p391 = scmp.lt.s32.totalorder %s29, 1
        %s392 = scalar_select %p391, %s29, 1
        %s393 = scalar_lea.vmem %s2, %s392
        %p394 = pneg %p110
        %p395 = pneg %p107
        %p396 = pneg %p131
        %p397 = pneg %p128
        %p398 = pneg %p152
        %p399 = pneg %p149
        %p400 = pneg %p173
        %p401 = pneg %p170
        %p402 = pneg %p194
        %p403 = pneg %p191
        %s404 = smul.u32 2, %s30
        %p405 = scmp.lt.s32.totalorder %s29, 1
        %s406 = scalar_select %p405, %s29, 1
        %p407 = scmp.lt.s32.totalorder %s404, 1
        %s408 = scalar_select %p407, %s404, 1
        %s409 = smul.addr %s406, 2
        %s410 = sadd.s32 %s408, %s409
        %s411 = smul.addr %s410, 4
        %s412 = scalar_lea.vmem %s7, %s411
        %p413 = pneg %p222
        %p414 = pneg %p219
        %p415 = pneg %p243
        %p416 = pneg %p240
        %p417 = pneg %p264
        %p418 = pneg %p261
        %p419 = pneg %p292
        %p420 = pneg %p289
        %s421 = sand.u32 %s279, 1
        %s422 = scalar_lea.sflag [#allocation6], %s421
        %s423 = sand.u32 %s279, 1
        %s424 = smul.addr %s423, 8
        %s425 = scalar_lea.vmem [#allocation7], %s424
        %p426 = scmp.lt.s32.totalorder %s29, 1
        %s427 = scalar_select %p426, %s29, 1
        %s428 = scalar_lea.vmem %s0, %s427
        %p429 = scmp.lt.s32.totalorder %s29, 1
        %s430 = scalar_select %p429, %s29, 1
        %s431 = smul.addr %s430, 8
        %s432 = scalar_lea.vmem %s1, %s431
        %p433 = scmp.lt.s32.totalorder %s29, 1
        %s434 = scalar_select %p433, %s29, 1
        %s435 = scalar_lea.vmem %s2, %s434
        %s436 = smul.u32 2, %s30
        %p437 = scmp.lt.s32.totalorder %s29, 1
        %s438 = scalar_select %p437, %s29, 1
        %p439 = scmp.lt.s32.totalorder %s436, 1
        %s440 = scalar_select %p439, %s436, 1
        %s441 = smul.addr %s438, 2
        %s442 = sadd.s32 %s440, %s441
        %s443 = smul.addr %s442, 4
        %s444 = scalar_lea.vmem %s7, %s443
        %s445 = smul.u32 2, %s30
        %s446 = smul.u32 2, %s30
        %p447 = scmp.eq.s32.totalorder %s30, 0
        // Predicated region
        $region65: #{tpu_custom_call.1} parent=59 // pred_check
          %p448 = pneg %p447
        $region66: #{tpu_custom_call.1} parent=59 // pred_check_branch
          %450 = sbr.rel (%p448) target = $region68
        $region67: #{tpu_custom_call.1} parent=59 // pred_region
          %v451 = vld [vmem:[%s428] sm:$0x1]
          %v452 = vadd.f32 %v451, 0.008
          %v453 = vrcp.pop 1.008
          %v454 = vmul.f32 %v452, %v453
          %v455 = vmul.f32 %v454, 1.5707964
          %v456 = vand.u32 2147483647, %v455
          %vm457 = vcmp.le.f32.partialorder %v456, 0.7853982
          %vm458 = vcmp.lt.s32.totalorder %v455, 0
          %v459 = vand.u32 %v455, 2139095040
          %v460 = vshrl.u32 %v459, 23
          %v461 = vsub.s32 %v460, 127
          %v462 = vand.u32 2147483647, %v455
          %v463 = vand.u32 %v462, 8388607
          %v464 = vor.u32 %v463, 8388608
          %v465 = vsub.s32 0, %v464
          %v466 = vadd.s32 %v461, 1
          %vm467 = vcmp.gt.s32.totalorder %v466, 0
          %v468 = vsel %vm467, %v466, 0
          %v469 = vshrl.u32 %v468, 5
          %v470 = vand.u32 %v468, 31
          %v471 = vsub.s32 32, %v470
          %v472 = vshrl.u32 683565275, %v471
          %v473 = vshll.u32 683565275, %v470
          %v474 = vshrl.u32 2475754826, %v471
          %v475 = vor.u32 %v473, %v474
          %v476 = vshll.u32 2475754826, %v470
          %v477 = vshrl.u32 2131351028, %v471
          %v478 = vor.u32 %v476, %v477
          %v479 = vshll.u32 2131351028, %v470
          %v480 = vshrl.u32 2102212464, %v471
          %v481 = vor.u32 %v479, %v480
          %v482 = vshll.u32 2102212464, %v470
          %v483 = vshrl.u32 920167782, %v471
          %v484 = vor.u32 %v482, %v483
          %v485 = vshll.u32 920167782, %v470
          %v486 = vshrl.u32 1326507024, %v471
          %v487 = vor.u32 %v485, %v486
          %vm488 = vcmp.lt.s32.totalorder %v469, 1
          %vm489 = vcmp.lt.s32.totalorder %v469, 2
          %vm490 = vcmp.lt.s32.totalorder %v469, 3
          %vm491 = vcmp.lt.s32.totalorder %v469, 4
          %v492 = vsel %vm488, %v472, %v475
          %v493 = vsel %vm491, %v481, 2102212464
          %v494 = vsel %vm490, %v478, %v493
          %v495 = vsel %vm489, %v492, %v494
          %v496 = vsel %vm488, %v475, %v478
          %v497 = vsel %vm491, %v484, 920167782
          %v498 = vsel %vm490, %v481, %v497
          %v499 = vsel %vm489, %v496, %v498
          %v500 = vsel %vm488, %v478, %v481
          %v501 = vsel %vm491, %v487, 1326507024
          %v502 = vsel %vm490, %v484, %v501
          %v503 = vsel %vm489, %v500, %v502
          %v504 = vshll.u32 %v464, 8
          %v505 = vmul.u32.u64.compose %v504, %v503
          %v506 = vextract.low.u32 %v505
          %v507 = vextract.high.u32 %v505
          %v508 = vmul.u32.u64.compose %v504, %v499
          %v509 = vextract.low.u32 %v508
          %v510 = vextract.high.u32 %v508
          %v511 = vmul.u32 %v504, %v495
          %v512 = vadd.s32 %v507, %v509
          %vm513 = vc.u32 %v507, %v509
          %v514 = vadd.s32 %v510, 1
          %v515 = vsel %vm513, %v514, %v510
          %v516 = vadd.s32 %v511, %v515
          %v517 = vadd.s32 %v516, 536870912
          %v518 = vshrl.u32 %v517, 30
          %v519 = vshll.u32 %v518, 30
          %v520 = vsub.s32 %v516, %v519
          %vm521 = vcmp.lt.s32.totalorder %v520, 0
          %v522 = vsub.s32 0, %v520
          %v523 = vsel %vm521, %v522, %v520
          %v524 = vclz %v523
          %v525 = vsub.s32 %v524, 2
          %vm526 = vcmp.gt.s32.totalorder 0, %v525
          %v527 = vsel %vm526, 0, %v525
          %v528 = vsub.s32 32, %v527
          %v529 = vshll.u32 %v520, %v527
          %v530 = vshrl.u32 %v512, %v528
          %v531 = vor.u32 %v529, %v530
          %v532 = vsub.s32 4294967266, %v527
          %v533 = vadd.s32 %v532, 127
          %v534 = vshll.u32 %v533, 23
          %v535 = vor.u32 4788187, %v534
          %v536 = vand.u32 2147483647, %v535
          %v538 = vcvt.s32.f32 %v531
          %v539 = vmul.f32 %v538, %v536
          %v540 = vxor.u32 %v539, 2147483648
          %v541 = vsel %vm458, %v540, %v539
          %v542 = vsub.s32 4, %v518
          %v543 = vsel %vm458, %v542, %v518
          %v544 = vsel %vm457, %v455, %v541
          %v545 = vsel %vm457, 0, %v543
          %v546 = vcosq.f32.pop %v544
          %v547 = vsinq.f32.pop %v544
          %vm548 = vweird.f32 %v455
          %v549 = vand.u32 %v545, 3
          %vm550 = vcmp.lt.s32.totalorder %v549, 2
          %vm551 = vcmp.eq.s32.totalorder %v549, 0
          %v552 = vxor.u32 %v547, 2147483648
          %v553 = vsel %vm551, %v546, %v552
          %vm554 = vcmp.eq.s32.totalorder %v549, 2
          %v555 = vxor.u32 %v546, 2147483648
          %v556 = vsel %vm554, %v555, %v547
          %v557 = vsel %vm550, %v553, %v556
          %v558 = vsel %vm548, nan, %v557
          %v559 = vmul.f32 %v558, %v558
          %v560 = vrcp.pop %v559
          %v561 = vmul.f32 1.0, %v560
          %v562 = vsub.f32 %v561, 1.0
          %v563 = vmax.f32 %v562, 1e-05
          %v564 = vlog2.pop %v563
          %v565 = vmul.f32 %v564, 0.6931472
          %v566 = vsub.f32 0.0, %v565
          %v567 = vld [vmem:[%s3] sm:$0x1]
          %569 = vset.pattern.permute.xlu0 0
          %570 = vperm.xlu0 %569, %v566
          %v571 = vpop.permute.xlu0 %570
          %v573 = vlaneseq
          %v574 = vshrl.u32 %v573, 7
          %v575 = vsub.s32 0, %v574
          %v576 = vrot.slane %v571, %v575
          %v577 = vmul.f32 %v576, %v567
          %v578 = vld [vmem:[#allocation4] sm:$0x1]
          %v579 = vadd.f32 %v577, %v578
          %v580 = vsub.f32 0.0, %v579
          %v581 = vmul.f32 %v580, 1.442695
          %v582 = vpow.pop %v581
          %v583 = vadd.f32 %v582, 1.0
          %v584 = vrcp.pop %v583
          %v585 = vmul.f32 1.0, %v584
          %v586 = vmul.f32 %v579, %v585
          %v587 = vld [vmem:[%s435] sm:$0x1]
          %v588 = vld [vmem:[%s432] sm:$0xff]
          %vm589 = vcmask 64512
          %v591 = vsel %vm589, %v587, 0
          %593 = vmatprep.subr.mxu0 0.0
          %594 = vmatpush1.msra.mxu0 %v588
          %595 = vmatprep.subr.mxu0 0.0
          %596 = vmatpush1.msra.mxu0 0.0
          %597 = vmatprep.subr.mxu0 0.0
          %598 = vmatpush1.msra.mxu0 0.0
          %599 = vmatprep.subr.mxu0 0.0
          %600 = vmatpush1.msra.mxu0 0.0
          %601 = vmatprep.subr.mxu0 0.0
          %602 = vmatpush1.msra.mxu0 0.0
          %603 = vmatprep.subr.mxu0 0.0
          %604 = vmatpush1.msra.mxu0 0.0
          %605 = vmatprep.subr.mxu0 0.0
          %606 = vmatpush1.msra.mxu0 0.0
          %607 = vmatprep.subr.mxu0 0.0
          %608 = vmatpush1.msra.mxu0 0.0
          %609 = vmatprep.subr.mxu0 0.0
          %610 = vmatpush1.msra.mxu0 0.0
          %611 = vmatprep.subr.mxu0 0.0
          %612 = vmatpush1.msra.mxu0 0.0
          %613 = vmatprep.subr.mxu0 0.0
          %614 = vmatpush1.msra.mxu0 0.0
          %615 = vmatprep.subr.mxu0 0.0
          %616 = vmatpush1.msra.mxu0 0.0
          %617 = vmatprep.subr.mxu0 0.0
          %618 = vmatpush1.msra.mxu0 0.0
          %619 = vmatprep.subr.mxu0 0.0
          %620 = vmatpush1.msra.mxu0 0.0
          %621 = vmatprep.subr.mxu0 0.0
          %622 = vmatpush1.msra.mxu0 0.0
          %623 = vmatprep.subr.mxu0 0.0
          %624 = vmatpush1.msra.mxu0 0.0
          %625 = vmatprep.subr.mxu0 0.0
          %626 = vmatpush1.msra.mxu0 0.0
          %627 = vmatprep.subr.mxu0 0.0
          %628 = vmatpush1.msra.mxu0 0.0
          %629 = vmatprep.subr.mxu0 0.0
          %630 = vmatpush1.msra.mxu0 0.0
          %631 = vmatprep.subr.mxu0 0.0
          %632 = vmatpush1.msra.mxu0 0.0
          %633 = vmatprep.subr.mxu0 0.0
          %634 = vmatpush1.msra.mxu0 0.0
          %635 = vmatprep.subr.mxu0 0.0
          %636 = vmatpush1.msra.mxu0 0.0
          %637 = vmatprep.subr.mxu0 0.0
          %638 = vmatpush1.msra.mxu0 0.0
          %639 = vmatprep.subr.mxu0 0.0
          %640 = vmatpush1.msra.mxu0 0.0
          %641 = vmatprep.subr.mxu0 0.0
          %642 = vmatpush1.msra.mxu0 0.0
          %643 = vmatprep.subr.mxu0 0.0
          %644 = vmatpush1.msra.mxu0 0.0
          %645 = vmatprep.subr.mxu0 0.0
          %646 = vmatpush1.msra.mxu0 0.0
          %647 = vmatprep.subr.mxu0 0.0
          %648 = vmatpush1.msra.mxu0 0.0
          %649 = vmatprep.subr.mxu0 0.0
          %650 = vmatpush1.msra.mxu0 0.0
          %651 = vmatprep.subr.mxu0 0.0
          %652 = vmatpush1.msra.mxu0 0.0
          %653 = vmatprep.subr.mxu0 0.0
          %654 = vmatpush1.msra.mxu0 0.0
          %655 = vmatprep.subr.mxu0 0.0
          %656 = vmatpush1.msra.mxu0 0.0
          %657 = vmatprep.mubr.f32.mxu0 0.0
          %658 = vmatmul.mubr.f32.gmra.mrb[0].mxu0 %v591
          %v659 = vpop.f32.mrb[0].mxu0
          %v660 = vadd.f32 0.0, %v659
          %v661 = vpop.f32.mrb[0].mxu0
          %662 = vdwg.mxu0
          %vm663 = vcmask 57344
          %v664 = vsel %vm663, %v587, 0.0
          %665 = vadd.xlane.f32.xlu0 %v664
          %v666 = vpop.xlane.xlu0 %665
          %v667 = vmax.f32 %v666, 1.0
          %v668 = vrcp.pop %v667
          %v669 = vmul.f32 %v660, %v668
          %v670 = vld [vmem:[%s5] sm:$0xff]
          %v671 = vld [vmem:[%s5 + $0x8] sm:$0xff]
          %v672 = vld [vmem:[%s5 + $0x10] sm:$0xff]
          %v673 = vld [vmem:[%s5 + $0x18] sm:$0xff]
          %vm674 = vcmask 261120
          %v676 = vsel %vm674, %v669, 0
          %678 = vmatprep.subr.mxu0 0.0
          %679 = vmatpush1.msra.mxu0 %v670
          %680 = vmatprep.subr.mxu0 0.0
          %681 = vmatpush1.msra.mxu0 %v671
          %682 = vmatprep.subr.mxu0 0.0
          %683 = vmatpush1.msra.mxu0 %v672
          %684 = vmatprep.subr.mxu0 0.0
          %685 = vmatpush1.msra.mxu0 %v673
          %686 = vmatprep.subr.mxu0 0.0
          %687 = vmatpush1.msra.mxu0 0.0
          %688 = vmatprep.subr.mxu0 0.0
          %689 = vmatpush1.msra.mxu0 0.0
          %690 = vmatprep.subr.mxu0 0.0
          %691 = vmatpush1.msra.mxu0 0.0
          %692 = vmatprep.subr.mxu0 0.0
          %693 = vmatpush1.msra.mxu0 0.0
          %694 = vmatprep.subr.mxu0 0.0
          %695 = vmatpush1.msra.mxu0 0.0
          %696 = vmatprep.subr.mxu0 0.0
          %697 = vmatpush1.msra.mxu0 0.0
          %698 = vmatprep.subr.mxu0 0.0
          %699 = vmatpush1.msra.mxu0 0.0
          %700 = vmatprep.subr.mxu0 0.0
          %701 = vmatpush1.msra.mxu0 0.0
          %702 = vmatprep.subr.mxu0 0.0
          %703 = vmatpush1.msra.mxu0 0.0
          %704 = vmatprep.subr.mxu0 0.0
          %705 = vmatpush1.msra.mxu0 0.0
          %706 = vmatprep.subr.mxu0 0.0
          %707 = vmatpush1.msra.mxu0 0.0
          %708 = vmatprep.subr.mxu0 0.0
          %709 = vmatpush1.msra.mxu0 0.0
          %710 = vmatprep.subr.mxu0 0.0
          %711 = vmatpush1.msra.mxu0 0.0
          %712 = vmatprep.subr.mxu0 0.0
          %713 = vmatpush1.msra.mxu0 0.0
          %714 = vmatprep.subr.mxu0 0.0
          %715 = vmatpush1.msra.mxu0 0.0
          %716 = vmatprep.subr.mxu0 0.0
          %717 = vmatpush1.msra.mxu0 0.0
          %718 = vmatprep.subr.mxu0 0.0
          %719 = vmatpush1.msra.mxu0 0.0
          %720 = vmatprep.subr.mxu0 0.0
          %721 = vmatpush1.msra.mxu0 0.0
          %722 = vmatprep.subr.mxu0 0.0
          %723 = vmatpush1.msra.mxu0 0.0
          %724 = vmatprep.subr.mxu0 0.0
          %725 = vmatpush1.msra.mxu0 0.0
          %726 = vmatprep.subr.mxu0 0.0
          %727 = vmatpush1.msra.mxu0 0.0
          %728 = vmatprep.subr.mxu0 0.0
          %729 = vmatpush1.msra.mxu0 0.0
          %730 = vmatprep.subr.mxu0 0.0
          %731 = vmatpush1.msra.mxu0 0.0
          %732 = vmatprep.subr.mxu0 0.0
          %733 = vmatpush1.msra.mxu0 0.0
          %734 = vmatprep.subr.mxu0 0.0
          %735 = vmatpush1.msra.mxu0 0.0
          %736 = vmatprep.subr.mxu0 0.0
          %737 = vmatpush1.msra.mxu0 0.0
          %738 = vmatprep.subr.mxu0 0.0
          %739 = vmatpush1.msra.mxu0 0.0
          %740 = vmatprep.subr.mxu0 0.0
          %741 = vmatpush1.msra.mxu0 0.0
          %742 = vmatprep.mubr.f32.mxu0 0.0
          %743 = vmatmul.mubr.f32.gmra.mrb[0].mxu0 %v676
          %v744 = vpop.f32.mrb[0].mxu0
          %v745 = vadd.f32 0.0, %v744
          %v746 = vpop.f32.mrb[0].mxu0
          %747 = vdwg.mxu0
          %v748 = vadd.f32 %v586, %v745
          %v749 = vld [vmem:[%s6] sm:$0xff]
          %v750 = vld [vmem:[%s6 + $0x8] sm:$0xff]
          %v751 = vld [vmem:[%s6 + $0x10] sm:$0xff]
          %v752 = vld [vmem:[%s6 + $0x18] sm:$0xff]
          %v754 = vsel %vm674, %v748, 0
          %756 = vmatprep.subr.mxu0 0.0
          %757 = vmatpush1.msra.mxu0 %v749
          %758 = vmatprep.subr.mxu0 0.0
          %759 = vmatpush1.msra.mxu0 %v750
          %760 = vmatprep.subr.mxu0 0.0
          %761 = vmatpush1.msra.mxu0 %v751
          %762 = vmatprep.subr.mxu0 0.0
          %763 = vmatpush1.msra.mxu0 %v752
          %764 = vmatprep.subr.mxu0 0.0
          %765 = vmatpush1.msra.mxu0 0.0
          %766 = vmatprep.subr.mxu0 0.0
          %767 = vmatpush1.msra.mxu0 0.0
          %768 = vmatprep.subr.mxu0 0.0
          %769 = vmatpush1.msra.mxu0 0.0
          %770 = vmatprep.subr.mxu0 0.0
          %771 = vmatpush1.msra.mxu0 0.0
          %772 = vmatprep.subr.mxu0 0.0
          %773 = vmatpush1.msra.mxu0 0.0
          %774 = vmatprep.subr.mxu0 0.0
          %775 = vmatpush1.msra.mxu0 0.0
          %776 = vmatprep.subr.mxu0 0.0
          %777 = vmatpush1.msra.mxu0 0.0
          %778 = vmatprep.subr.mxu0 0.0
          %779 = vmatpush1.msra.mxu0 0.0
          %780 = vmatprep.subr.mxu0 0.0
          %781 = vmatpush1.msra.mxu0 0.0
          %782 = vmatprep.subr.mxu0 0.0
          %783 = vmatpush1.msra.mxu0 0.0
          %784 = vmatprep.subr.mxu0 0.0
          %785 = vmatpush1.msra.mxu0 0.0
          %786 = vmatprep.subr.mxu0 0.0
          %787 = vmatpush1.msra.mxu0 0.0
          %788 = vmatprep.subr.mxu0 0.0
          %789 = vmatpush1.msra.mxu0 0.0
          %790 = vmatprep.subr.mxu0 0.0
          %791 = vmatpush1.msra.mxu0 0.0
          %792 = vmatprep.subr.mxu0 0.0
          %793 = vmatpush1.msra.mxu0 0.0
          %794 = vmatprep.subr.mxu0 0.0
          %795 = vmatpush1.msra.mxu0 0.0
          %796 = vmatprep.subr.mxu0 0.0
          %797 = vmatpush1.msra.mxu0 0.0
          %798 = vmatprep.subr.mxu0 0.0
          %799 = vmatpush1.msra.mxu0 0.0
          %800 = vmatprep.subr.mxu0 0.0
          %801 = vmatpush1.msra.mxu0 0.0
          %802 = vmatprep.subr.mxu0 0.0
          %803 = vmatpush1.msra.mxu0 0.0
          %804 = vmatprep.subr.mxu0 0.0
          %805 = vmatpush1.msra.mxu0 0.0
          %806 = vmatprep.subr.mxu0 0.0
          %807 = vmatpush1.msra.mxu0 0.0
          %808 = vmatprep.subr.mxu0 0.0
          %809 = vmatpush1.msra.mxu0 0.0
          %810 = vmatprep.subr.mxu0 0.0
          %811 = vmatpush1.msra.mxu0 0.0
          %812 = vmatprep.subr.mxu0 0.0
          %813 = vmatpush1.msra.mxu0 0.0
          %814 = vmatprep.subr.mxu0 0.0
          %815 = vmatpush1.msra.mxu0 0.0
          %816 = vmatprep.subr.mxu0 0.0
          %817 = vmatpush1.msra.mxu0 0.0
          %818 = vmatprep.subr.mxu0 0.0
          %819 = vmatpush1.msra.mxu0 0.0
          %820 = vmatprep.mubr.f32.mxu0 0.0
          %821 = vmatmul.mubr.f32.gmra.mrb[0].mxu0 %v754
          %v822 = vpop.f32.mrb[0].mxu0
          %v823 = vadd.f32 0.0, %v822
          %v824 = vpop.f32.mrb[0].mxu0
          %825 = vdwg.mxu0
          %v826 = vlaneseq
          %v827 = vshrl.u32 %v826, 7
          %v828 = vsub.s32 0, %v827
          %v829 = vrot.slane %v823, %v828
          %v830 = vlaneseq
          %v831 = vand.u32 %v830, 127
          %v832 = vlaneseq
          %v833 = vshrl.u32 %v832, 7
          %vm834 = vcmp.eq.s32.totalorder %v831, %v833
          %v835 = vsel %vm834, %v829, 0.0
          %vm836 = vcmask 60416
          %v837 = vsel %vm836, %v835, 0.0
          %838 = vadd.xlane.f32.xlu0 %v837
          %v839 = vpop.xlane.xlu0 %838
          %v840 = vadd.f32 %v839, 1.0
          %v841 = vadd.s32 %v833, 4
          %vm842 = vcmp.eq.s32.totalorder %v831, %v841
          %v843 = vsel %vm842, %v829, 0.0
          %v844 = vsel %vm836, %v843, 0.0
          %845 = vadd.xlane.f32.xlu0 %v844
          %v846 = vpop.xlane.xlu0 %845
          %vm847 = vcmask 3072
          %848 = vst.msk [vmem:[#allocation2] sm:$0xf] %vm847, %v840
          %849 = vst.msk [vmem:[#allocation3] sm:$0xf] %vm847, %v846
        $region68: #{tpu_custom_call.1} parent=59 // pred_fallthru
          _
        %v850 = vld [vmem:[%s444] sm:$0xff]
        %v851 = vld [vmem:[#allocation2] sm:$0xf]
        %853 = vset.pattern.permute.xlu0 0
        %854 = vperm.xlu0 %853, %v851
        %v855 = vpop.permute.xlu0 %854
        %v857 = vunpack.c.l.s4 839922192
        %v858 = vunpack.c.0.s8 %v857
        %v859 = vlaneseq
        %v860 = vshrl.u32 %v859, 7
        %v861 = vsub.s32 %v858, %v860
        %v862 = vrot.slane %v855, %v861
        %v864 = vmul.f32 %v850, %v862
        %v865 = vld [vmem:[#allocation3] sm:$0xf]
        %867 = vset.pattern.permute.xlu0 0
        %868 = vperm.xlu0 %867, %v865
        %v869 = vpop.permute.xlu0 %868
        %v871 = vunpack.c.l.s4 839922192
        %v872 = vunpack.c.0.s8 %v871
        %v873 = vlaneseq
        %v874 = vshrl.u32 %v873, 7
        %v875 = vsub.s32 %v872, %v874
        %v876 = vrot.slane %v869, %v875
        %v878 = vadd.f32 %v864, %v876
        %v879 = vld [vmem:[%s8] sm:$0xf]
        %v880 = vld [vmem:[%s9] sm:$0xf]
        %882 = vset.pattern.permute.xlu0 0
        %883 = vperm.xlu0 %882, %v880
        %v884 = vpop.permute.xlu0 %883
        %887 = vset.pattern.permute.xlu0 0
        %888 = vperm.xlu0 %887, %v879
        %v889 = vpop.permute.xlu0 %888
        %v892 = vlaneseq
        %v893 = vshrl.u32 %v892, 7
        %v894 = vsub.s32 0, %v893
        %v895 = vrot.slane %v878, %v894
        %v896 = vlaneseq
        %v897 = vshrl.u32 %v896, 7
        %v898 = vsub.s32 4, %v897
        %v899 = vrot.slane %v878, %v898
        %v902 = vlaneseq
        %v903 = vshrl.u32 %v902, 7
        %v904 = vsub.s32 0, %v903
        %v905 = vrot.slane %v895, %v904
        %v906 = vlaneseq
        %v907 = vshrl.u32 %v906, 7
        %v908 = vsub.s32 0, %v907
        %v909 = vrot.slane %v899, %v908
        %v910 = vmul.f32 %v889, %v905
        %v911 = vmul.f32 %v889, %v909
        %v912 = vadd.f32 %v884, %v910
        %v913 = vadd.f32 %v884, %v911
        %914 = vset.pattern.permute.xlu0 1
        %915 = vperm.xlu0 %914, %v879
        %v916 = vpop.permute.xlu0 %915
        %v918 = vlaneseq
        %v919 = vshrl.u32 %v918, 7
        %v920 = vsub.s32 1, %v919
        %v921 = vrot.slane %v878, %v920
        %v922 = vlaneseq
        %v923 = vshrl.u32 %v922, 7
        %v924 = vsub.s32 5, %v923
        %v925 = vrot.slane %v878, %v924
        %v928 = vlaneseq
        %v929 = vshrl.u32 %v928, 7
        %v930 = vsub.s32 1, %v929
        %v931 = vrot.slane %v921, %v930
        %v932 = vlaneseq
        %v933 = vshrl.u32 %v932, 7
        %v934 = vsub.s32 1, %v933
        %v935 = vrot.slane %v925, %v934
        %v936 = vmul.f32 %v916, %v931
        %v937 = vmul.f32 %v916, %v935
        %v938 = vadd.f32 %v912, %v936
        %v939 = vadd.f32 %v913, %v937
        %940 = vset.pattern.permute.xlu0 2
        %941 = vperm.xlu0 %940, %v879
        %v942 = vpop.permute.xlu0 %941
        %v944 = vlaneseq
        %v945 = vshrl.u32 %v944, 7
        %v946 = vsub.s32 2, %v945
        %v947 = vrot.slane %v878, %v946
        %v948 = vlaneseq
        %v949 = vshrl.u32 %v948, 7
        %v950 = vsub.s32 6, %v949
        %v951 = vrot.slane %v878, %v950
        %v954 = vlaneseq
        %v955 = vshrl.u32 %v954, 7
        %v956 = vsub.s32 2, %v955
        %v957 = vrot.slane %v947, %v956
        %v958 = vlaneseq
        %v959 = vshrl.u32 %v958, 7
        %v960 = vsub.s32 2, %v959
        %v961 = vrot.slane %v951, %v960
        %v962 = vmul.f32 %v942, %v957
        %v963 = vmul.f32 %v942, %v961
        %v964 = vadd.f32 %v938, %v962
        %v965 = vadd.f32 %v939, %v963
        %966 = vset.pattern.permute.xlu0 3
        %967 = vperm.xlu0 %966, %v879
        %v968 = vpop.permute.xlu0 %967
        %v970 = vlaneseq
        %v971 = vshrl.u32 %v970, 7
        %v972 = vsub.s32 3, %v971
        %v973 = vrot.slane %v878, %v972
        %v974 = vlaneseq
        %v975 = vshrl.u32 %v974, 7
        %v976 = vsub.s32 7, %v975
        %v977 = vrot.slane %v878, %v976
        %v980 = vlaneseq
        %v981 = vshrl.u32 %v980, 7
        %v982 = vsub.s32 3, %v981
        %v983 = vrot.slane %v973, %v982
        %v984 = vlaneseq
        %v985 = vshrl.u32 %v984, 7
        %v986 = vsub.s32 3, %v985
        %v987 = vrot.slane %v977, %v986
        %v988 = vmul.f32 %v968, %v983
        %v989 = vmul.f32 %v968, %v987
        %v990 = vadd.f32 %v964, %v988
        %v991 = vadd.f32 %v965, %v989
        %v994 = vcombine.low %v990, %v991
        %996 = vst [vmem:[%s425] sm:$0xff] %v994
        %s997 = sand.u32 %s279, 1
        %s998 = scalar_lea.sflag [#allocation6], %s997
        %s999 = sand.u32 %s279, 1
        %s1000 = smul.addr %s999, 8
        %s1001 = scalar_lea.vmem [#allocation7], %s1000
        // Predicated region
        $region69: #{tpu_custom_call.1} parent=59 // pred_check
          %p1002 = pneg %p289
        $region70: #{tpu_custom_call.1} parent=59 // pred_check_branch
          %1004 = sbr.rel (%p1002) target = $region72
        $region71: #{tpu_custom_call.1} parent=59 // pred_region
          %s1005 = smul.u32 2, %s30
          %s1007 = ssub.s32 128, 128
          %1008 = vsyncadd %s998, %s1007
          %s1009 = smul.addr %s29, 2
          %s1010 = sadd.s32 %s1005, %s1009
          %s1011 = smul.addr %s1010, 64
          %s1012 = scalar_lea.hbm %s10, %s1011
          %s1014 = sshll.u32 %s1001, 4
          %s1015 = int_to_ptr.vmem [resolvable:$true] %s1014
          %1017 = dma.vmem_to_hbm [thread:$0]  %s1015, 128, %s1012, %s998
        $region72: #{tpu_custom_call.1} parent=59 // pred_fallthru
          _
      $region60: #{tpu_custom_call.1} parent=5 // pred_fallthru
        _
      %p1018 = scmp.le.s32.totalorder 2, %s20
      // Predicated region
      $region73: #{tpu_custom_call.1} parent=5 // pred_check
        %p1019 = pneg %p1018
      $region74: #{tpu_custom_call.1} parent=5 // pred_check_branch
        %1021 = sbr.rel (%p1019) target = $region76
      $region75: #{tpu_custom_call.1} parent=5 // pred_region
        %s1022 = ssub.s32 %s20, 2
        // Predicated region
        $region77: #{tpu_custom_call.1} parent=75 // pred_check
          %p1023 = pneg %p295
        $region78: #{tpu_custom_call.1} parent=75 // pred_check_branch
          %1025 = sbr.rel (%p1023) target = $region80
        $region79: #{tpu_custom_call.1} parent=75 // pred_region
          %s1026 = sand.u32 %s280, 1
          %s1027 = scalar_lea.sflag [#allocation6], %s1026
          %s1028 = sand.u32 %s280, 1
          %s1029 = smul.addr %s1028, 8
          %s1030 = scalar_lea.vmem [#allocation7], %s1029
          %1031 = dma.done %s1027, 128
        $region80: #{tpu_custom_call.1} parent=75 // pred_fallthru
          _
      $region76: #{tpu_custom_call.1} parent=5 // pred_fallthru
        _
    $region6: #{tpu_custom_call.1} parent=1 // loop_footer
      %s24 = sadd.s32 1, %s20
    $region7: #{tpu_custom_call.1} parent=1 // loop_footer_branch
      %19 = sbr.rel target = $region3
    $region8: #{tpu_custom_call.1} parent=1 // loop_exit
      _
    %1032 = vsyncpa [#allocation5], 1
    %s1033 = scalar_lea.sflag [#allocation5], 1
    %1034 = vsyncpa %s1033, 1
    %1035 = vsyncpa [#allocation6], 1
    %s1036 = scalar_lea.sflag [#allocation6], 1
    %1037 = vsyncpa %s1036, 1

</llo_original>
